<compile_context>
chip_gen: v5e
topology: v5e:2x2
jax: 0.10.0
libtpu: 0.0.40
codegen_flags: <defaults>
</compile_context>

<pallas_src>
import functools
import math

import jax
import jax.numpy as jnp
from jax.experimental import pallas as pl
from jax.experimental.pallas import tpu as pltpu

_LANE = 128
_SUBLANE = 8


def _round_up(x, m):
    return (x + m - 1) // m * m


# --------------------------------------------------------------------------
# Kernel
# --------------------------------------------------------------------------
def _football_ff_kernel(
    x_ref,                 # [tile_p, pack*d_in]   pack obs rows per packed row
    w1_ref, b1_ref,        # block-diagonal bf16 weights / f32 biases
    w2_ref, b2_ref,
    w3_ref, b3_ref,
    wh_ref, bh_ref,        # fused (pi | value) head with w4/b4 folded in, lane padded
    out_ref,               # [tile_p, pack*n_lanes] bf16
    *, n_act, n_lanes, pack,
):
    """One row-tile of the forward pass: bf16 MLP trunk + fused pi/value head."""
    x = x_ref[...].astype(jnp.bfloat16)   # cast in-kernel (hidden under DMA/MXU)

    def dense_relu(h, w_ref, b_ref):
        h = jnp.dot(h, w_ref[...], preferred_element_type=jnp.float32) + b_ref[...]
        return jnp.maximum(h, 0.0).astype(jnp.bfloat16)

    h = dense_relu(x, w1_ref, b1_ref)
    h = dense_relu(h, w2_ref, b2_ref)
    h = dense_relu(h, w3_ref, b3_ref)

    # Fused heads: one lane-dense matmul producing [tile_p, pack*n_lanes].
    fused = jnp.dot(h, wh_ref[...], preferred_element_type=jnp.float32) + bh_ref[...]

    rows = fused.shape[0]
    lane = jax.lax.broadcasted_iota(jnp.int32, (rows, n_lanes), 1)

    def head_part(f):
        # f: [rows, n_lanes] f32.  Lanes [0, n_act) = pi logits, lane n_act = v.
        masked = jnp.where(lane < n_act, f, -jnp.inf)
        m = jnp.max(masked, axis=-1, keepdims=True)
        e = jnp.exp(masked - m)                       # padded lanes -> exp(-inf) = 0
        denom = jnp.sum(e, axis=-1, keepdims=True)
        pi = e * pl.reciprocal(denom, approx=False)   # EUP slot; rows sum to ~1
        # v is stored as a bf16 hi/lo pair (lanes n_act, n_act+1) so the wrapper
        # reconstructs it at ~f32 precision from the bf16 output slab.
        lo = pltpu.roll(f - f.astype(jnp.bfloat16).astype(jnp.float32), 1, 1)
        out = jnp.where(lane == n_act, f, jnp.where(lane == n_act + 1, lo, pi))
        return out.astype(out_ref.dtype)

    if pack == 1:
        out_ref[...] = head_part(fused)
    else:
        # Static, 128-aligned lane slices / concat -> pure vreg selects.
        parts = [head_part(fused[:, b * n_lanes:(b + 1) * n_lanes])
                 for b in range(pack)]
        out_ref[...] = jnp.concatenate(parts, axis=-1)


# --------------------------------------------------------------------------
# One-time parameter preparation (hoisted out of the per-call path)
# --------------------------------------------------------------------------
def prepare_params(params):
    """Fold + fuse + pack + cast the weights once, ahead of any forward call.

    * w4/b4 (head output Linear) are folded into the pi/value heads (exact:
      no nonlinearity in between) and both heads fused into one lane-padded
      matmul.
    * When all trunk widths are equal and divide 128 (e.g. 32 -> pack=4),
      weights are made block-diagonal so `pack` observation rows share one
      128-lane vector through the whole trunk.
    * Matmul weights are cast to bf16 (f32 accumulation in the kernel).
    Returns (kernel_arrays, static_meta).
    """
    d_in, h1 = params["w1"].shape
    h2 = params["w2"].shape[1]
    h3 = params["w3"].shape[1]
    n_act = params["wpi"].shape[1]

    if d_in == h1 == h2 == h3 and d_in < _LANE and _LANE % d_in == 0:
        pack = _LANE // d_in
    else:
        pack = 1
    n_lanes = _round_up(n_act + 2, _LANE)   # +2: v stored as a bf16 hi/lo pair

    # Fold w4/b4 into the fused (pi | value) head, then lane-pad.
    w4, b4 = params["w4"], params["b4"]
    wh = jnp.concatenate([w4 @ params["wpi"], w4 @ params["wv"]], axis=1)
    bh = jnp.concatenate([b4 @ params["wpi"] + params["bpi"],
                          b4 @ params["wv"] + params["bv"]], axis=1)
    wh = jnp.pad(wh, ((0, 0), (0, n_lanes - (n_act + 1))))
    bh = jnp.pad(bh, ((0, 0), (0, n_lanes - (n_act + 1))))

    def block_diag(w):
        if pack == 1:
            return w
        kin, kout = w.shape
        out = jnp.zeros((pack * kin, pack * kout), w.dtype)
        for b in range(pack):
            out = out.at[b * kin:(b + 1) * kin, b * kout:(b + 1) * kout].set(w)
        return out

    def tile_bias(b):
        return b if pack == 1 else jnp.tile(b, (1, pack))

    kparams = dict(
        w1=block_diag(params["w1"]).astype(jnp.bfloat16), b1=tile_bias(params["b1"]),
        w2=block_diag(params["w2"]).astype(jnp.bfloat16), b2=tile_bias(params["b2"]),
        w3=block_diag(params["w3"]).astype(jnp.bfloat16), b3=tile_bias(params["b3"]),
        wh=block_diag(wh).astype(jnp.bfloat16),           bh=tile_bias(bh),
    )
    meta = dict(n_act=int(n_act), n_lanes=int(n_lanes), pack=int(pack),
                d_in=int(d_in))
    return kparams, meta


# --------------------------------------------------------------------------
# Forward wrapper
# --------------------------------------------------------------------------
@functools.partial(jax.jit, static_argnames=("n_act", "n_lanes", "pack", "d_in"))
def _forward_impl(observation, kp, *, n_act, n_lanes, pack, d_in):
    obs_shape = observation.shape
    assert obs_shape[-1] == d_in
    lead_shape = obs_shape[:-1]              # (), (B,), or (T, B)
    n_rows = math.prod(lead_shape)
    x = observation.reshape(n_rows, d_in)    # native dtype; cast in-kernel

    # Pack `pack` consecutive rows per 128-lane vector: free row-major reshape.
    # (A <= pack-1 row pad copy only happens when T*B is not a pack multiple.)
    n_rows_pad = _round_up(n_rows, pack)
    if n_rows_pad != n_rows:
        x = jnp.pad(x, ((0, n_rows_pad - n_rows), (0, 0)))
    rows_p = n_rows_pad // pack
    x = x.reshape(rows_p, pack * d_in)

    # Row tiling: large tiles (amortize the ~0.35us per-step overhead), a
    # pl.cdiv grid with a masked partial last block (no jnp.pad copy of x),
    # and >=2 grid steps for moderate batches so v7x's 2nd core has work.
    max_tile_rows = 4096 if pack > 1 else 2048
    max_tile_p = max(_SUBLANE, max_tile_rows // pack)
    if rows_p <= _SUBLANE:
        tile_p = rows_p                       # block == full row dim
    else:
        n_tiles = pl.cdiv(rows_p, max_tile_p)
        if rows_p * pack >= 512:
            n_tiles = max(n_tiles, 2)
        tile_p = _round_up(pl.cdiv(rows_p, n_tiles), _SUBLANE)
        tile_p = min(tile_p, rows_p)
    grid = (pl.cdiv(rows_p, tile_p),)

    out_lanes = pack * n_lanes
    w_args = (kp["w1"], kp["b1"], kp["w2"], kp["b2"],
              kp["w3"], kp["b3"], kp["wh"], kp["bh"])

    def const_spec(a):
        # Small weights/biases: full block, constant index -> VMEM-resident.
        return pl.BlockSpec(a.shape, lambda i: (0, 0))

    flops = 2 * rows_p * sum(int(w.shape[0]) * int(w.shape[1])
                             for w in (kp["w1"], kp["w2"], kp["w3"], kp["wh"]))
    bytes_accessed = (x.size * x.dtype.itemsize
                      + sum(w.size * w.dtype.itemsize for w in w_args)
                      + rows_p * out_lanes * 2)
    cost = pl.CostEstimate(flops=flops,
                           transcendentals=rows_p * out_lanes,
                           bytes_accessed=bytes_accessed)

    out = pl.pallas_call(
        functools.partial(_football_ff_kernel,
                          n_act=n_act, n_lanes=n_lanes, pack=pack),
        out_shape=jax.ShapeDtypeStruct((rows_p, out_lanes), jnp.bfloat16),
        grid=grid,
        in_specs=[pl.BlockSpec((tile_p, pack * d_in), lambda i: (i, 0))]
                 + [const_spec(a) for a in w_args],
        out_specs=pl.BlockSpec((tile_p, out_lanes), lambda i: (i, 0)),
        compiler_params=pltpu.CompilerParams(
            dimension_semantics=("parallel",)),
        cost_estimate=cost,
    )(x, *w_args)

    # Unpack: (rows_p, pack*n_lanes) row-major == (n_rows_pad, n_lanes) -> free.
    out = out.reshape(n_rows_pad, n_lanes)
    pi = out[:n_rows, :n_act].astype(jnp.float32).reshape(lead_shape + (n_act,))
    v = (out[:n_rows, n_act].astype(jnp.float32)
         + out[:n_rows, n_act + 1].astype(jnp.float32)).reshape(lead_shape)
    return pi, v


def football_ff_forward(observation, prepared, prev_action=None, prev_reward=None):
    """Forward pass; prev_action / prev_reward are unused (as in the module)."""
    kparams, meta = prepared
    return _forward_impl(observation, kparams, **meta)


# --------------------------------------------------------------------------
# Parameter init + pure-JAX reference (for validation)
# --------------------------------------------------------------------------
def init_params(key, input_size, hidden_sizes, output_size):
    """PyTorch-Linear-style init: U(-1/sqrt(fan_in), 1/sqrt(fan_in)); w is [in, out]."""
    sizes = [input_size] + list(hidden_sizes) + [output_size]
    params = {}
    keys = jax.random.split(key, 2 * (len(sizes) - 1) + 4)
    ki = 0
    for li in range(len(sizes) - 1):
        fan_in, fan_out = sizes[li], sizes[li + 1]
        bound = 1.0 / jnp.sqrt(jnp.float32(fan_in))
        params[f"w{li + 1}"] = jax.random.uniform(
            keys[ki], (fan_in, fan_out), jnp.float32, -bound, bound); ki += 1
        params[f"b{li + 1}"] = jax.random.uniform(
            keys[ki], (1, fan_out), jnp.float32, -bound, bound); ki += 1
    bound = 1.0 / jnp.sqrt(jnp.float32(output_size))
    params["wpi"] = jax.random.uniform(
        keys[ki], (output_size, output_size), jnp.float32, -bound, bound); ki += 1
    params["bpi"] = jax.random.uniform(
        keys[ki], (1, output_size), jnp.float32, -bound, bound); ki += 1
    params["wv"] = jax.random.uniform(
        keys[ki], (output_size, 1), jnp.float32, -bound, bound); ki += 1
    params["bv"] = jax.random.uniform(
        keys[ki], (1, 1), jnp.float32, -bound, bound); ki += 1
    return params


def _reference_forward(observation, params):
    d_in = params["w1"].shape[0]
    lead_shape = observation.shape[:-1]
    n_rows = math.prod(lead_shape)
    x = observation.reshape(n_rows, d_in).astype(jnp.float32)
    h = jnp.maximum(x @ params["w1"] + params["b1"], 0.0)
    h = jnp.maximum(h @ params["w2"] + params["b2"], 0.0)
    h = jnp.maximum(h @ params["w3"] + params["b3"], 0.0)
    fc_out = h @ params["w4"] + params["b4"]
    pi = jax.nn.softmax(fc_out @ params["wpi"] + params["bpi"], axis=-1)
    v = (fc_out @ params["wv"] + params["bv"])[:, 0]
    return pi.reshape(lead_shape + (pi.shape[-1],)), v.reshape(lead_shape)


# --------------------------------------------------------------------------
if __name__ == "__main__":
    key = jax.random.PRNGKey(0)
    k_param, k_obs, k_param2, k_obs2, k_obs3 = jax.random.split(key, 5)

    # Case 1: packed fast path (all trunk widths 32 -> 4 rows per 128 lanes).
    B = 2
    INPUT_SIZE = 32
    HIDDEN_SIZES = [32, 32, 32]
    OUTPUT_SIZE = 8  # number of actions

    params = init_params(k_param, INPUT_SIZE, HIDDEN_SIZES, OUTPUT_SIZE)
    prepared = prepare_params(params)   # one-time weight massaging

    # TODO(synk): module docstring mentions uint8 images scaled to [0,1], but the
    # forward pass as written applies no /255 scaling, so we feed float32 as-is.
    observation = jax.random.uniform(k_obs, (B, INPUT_SIZE), jnp.float32)
    prev_action = jnp.zeros((B,), jnp.int32)    # unused by forward
    prev_reward = jnp.zeros((B,), jnp.float32)  # unused by forward

    pi, v = football_ff_forward(observation, prepared, prev_action, prev_reward)
    jax.block_until_ready((pi, v))
    assert pi.shape == (B, OUTPUT_SIZE) and v.shape == (B,)
    assert bool(jnp.allclose(jnp.sum(pi, axis=-1), 1.0, atol=1e-2))
    pi_ref, v_ref = _reference_forward(observation, params)
    assert bool(jnp.allclose(pi, pi_ref, atol=1e-2, rtol=1e-2))   # bf16 trunk tol
    assert bool(jnp.allclose(v, v_ref, atol=1e-2, rtol=1e-2))

    # Case 2: [T, B] leading dims, T*B not a multiple of the pack factor.
    T, B2 = 3, 5
    obs_tb = jax.random.uniform(k_obs2, (T, B2, INPUT_SIZE), jnp.float32)
    pi_tb, v_tb = football_ff_forward(obs_tb, prepared)
    jax.block_until_ready((pi_tb, v_tb))
    assert pi_tb.shape == (T, B2, OUTPUT_SIZE) and v_tb.shape == (T, B2)
    pi_ref, v_ref = _reference_forward(obs_tb, params)
    assert bool(jnp.allclose(pi_tb, pi_ref, atol=1e-2, rtol=1e-2))
    assert bool(jnp.allclose(v_tb, v_ref, atol=1e-2, rtol=1e-2))

    # Case 3: generic (unpacked, pack=1) path when trunk widths do not divide 128.
    params_g = init_params(k_param2, 24, [40, 40, 40], 6)
    prepared_g = prepare_params(params_g)
    obs_g = jax.random.uniform(k_obs3, (5, 24), jnp.float32)
    pi_g, v_g = football_ff_forward(obs_g, prepared_g)
    jax.block_until_ready((pi_g, v_g))
    assert pi_g.shape == (5, 6) and v_g.shape == (5,)
    pi_ref, v_ref = _reference_forward(obs_g, params_g)
    assert bool(jnp.allclose(pi_g, pi_ref, atol=1e-2, rtol=1e-2))
    assert bool(jnp.allclose(v_g, v_ref, atol=1e-2, rtol=1e-2))

    print("KERNEL_OK")
</pallas_src>

<mosaic_0001>
module attributes {stable_mosaic.version = 11 : i64} {
  func.func @_football_ff_kernel(%arg0: i32, %arg1: memref<1x128xf32, #tpu.memory_space<vmem>>, %arg2: memref<128x128xbf16, #tpu.memory_space<vmem>>, %arg3: memref<1x128xf32, #tpu.memory_space<vmem>>, %arg4: memref<128x128xbf16, #tpu.memory_space<vmem>>, %arg5: memref<1x128xf32, #tpu.memory_space<vmem>>, %arg6: memref<128x128xbf16, #tpu.memory_space<vmem>>, %arg7: memref<1x128xf32, #tpu.memory_space<vmem>>, %arg8: memref<128x512xbf16, #tpu.memory_space<vmem>>, %arg9: memref<1x512xf32, #tpu.memory_space<vmem>>, %arg10: memref<1x512xbf16, #tpu.memory_space<vmem>>) attributes {dimension_semantics = [#tpu.dimension_semantics<parallel>], iteration_bounds = array<i64: 1>, scalar_prefetch = 0 : i64, scratch_operands = 0 : i64, tpu.core_type = #tpu.core_type<tc>, window_params = [{transform_indices = @transform_0, window_bounds = array<i64: 1, 128>}, {pipeline_mode = #tpu.pipeline_mode<synchronous>, transform_indices = @transform_1, window_bounds = array<i64: 128, 128>}, {pipeline_mode = #tpu.pipeline_mode<synchronous>, transform_indices = @transform_2, window_bounds = array<i64: 1, 128>}, {pipeline_mode = #tpu.pipeline_mode<synchronous>, transform_indices = @transform_3, window_bounds = array<i64: 128, 128>}, {pipeline_mode = #tpu.pipeline_mode<synchronous>, transform_indices = @transform_4, window_bounds = array<i64: 1, 128>}, {pipeline_mode = #tpu.pipeline_mode<synchronous>, transform_indices = @transform_5, window_bounds = array<i64: 128, 128>}, {pipeline_mode = #tpu.pipeline_mode<synchronous>, transform_indices = @transform_6, window_bounds = array<i64: 1, 128>}, {pipeline_mode = #tpu.pipeline_mode<synchronous>, transform_indices = @transform_7, window_bounds = array<i64: 128, 512>}, {pipeline_mode = #tpu.pipeline_mode<synchronous>, transform_indices = @transform_8, window_bounds = array<i64: 1, 512>}, {transform_indices = @transform_9, window_bounds = array<i64: 1, 512>}]} {
    %c0 = arith.constant 0 : index
    %c0_0 = arith.constant 0 : index
    %0 = vector.load %arg1[%c0, %c0_0] : memref<1x128xf32, #tpu.memory_space<vmem>>, vector<1x128xf32>
    %1 = arith.truncf %0 : vector<1x128xf32> to vector<1x128xbf16>
    %c0_1 = arith.constant 0 : index
    %c0_2 = arith.constant 0 : index
    %2 = vector.load %arg2[%c0_1, %c0_2] : memref<128x128xbf16, #tpu.memory_space<vmem>>, vector<128x128xbf16>
    %cst = arith.constant dense<0.000000e+00> : vector<1x128xf32>
    %3 = tpu.matmul %1, %2, %cst {dimension_numbers = #tpu.dot_dimension_numbers<[1], [0], [0], [1], [0, 0, 1, 1], [], []>} : vector<1x128xbf16>, vector<128x128xbf16>, vector<1x128xf32> -> vector<1x128xf32>
    %c0_3 = arith.constant 0 : index
    %c0_4 = arith.constant 0 : index
    %4 = vector.load %arg3[%c0_3, %c0_4] : memref<1x128xf32, #tpu.memory_space<vmem>>, vector<1x128xf32>
    %5 = arith.addf %3, %4 : vector<1x128xf32>
    %cst_5 = arith.constant 0.000000e+00 : f32
    %6 = vector.broadcast %cst_5 : f32 to vector<1x128xf32>
    %7 = arith.maximumf %5, %6 : vector<1x128xf32>
    %8 = arith.truncf %7 : vector<1x128xf32> to vector<1x128xbf16>
    %c0_6 = arith.constant 0 : index
    %c0_7 = arith.constant 0 : index
    %9 = vector.load %arg4[%c0_6, %c0_7] : memref<128x128xbf16, #tpu.memory_space<vmem>>, vector<128x128xbf16>
    %cst_8 = arith.constant dense<0.000000e+00> : vector<1x128xf32>
    %10 = tpu.matmul %8, %9, %cst_8 {dimension_numbers = #tpu.dot_dimension_numbers<[1], [0], [0], [1], [0, 0, 1, 1], [], []>} : vector<1x128xbf16>, vector<128x128xbf16>, vector<1x128xf32> -> vector<1x128xf32>
    %c0_9 = arith.constant 0 : index
    %c0_10 = arith.constant 0 : index
    %11 = vector.load %arg5[%c0_9, %c0_10] : memref<1x128xf32, #tpu.memory_space<vmem>>, vector<1x128xf32>
    %12 = arith.addf %10, %11 : vector<1x128xf32>
    %cst_11 = arith.constant 0.000000e+00 : f32
    %13 = vector.broadcast %cst_11 : f32 to vector<1x128xf32>
    %14 = arith.maximumf %12, %13 : vector<1x128xf32>
    %15 = arith.truncf %14 : vector<1x128xf32> to vector<1x128xbf16>
    %c0_12 = arith.constant 0 : index
    %c0_13 = arith.constant 0 : index
    %16 = vector.load %arg6[%c0_12, %c0_13] : memref<128x128xbf16, #tpu.memory_space<vmem>>, vector<128x128xbf16>
    %cst_14 = arith.constant dense<0.000000e+00> : vector<1x128xf32>
    %17 = tpu.matmul %15, %16, %cst_14 {dimension_numbers = #tpu.dot_dimension_numbers<[1], [0], [0], [1], [0, 0, 1, 1], [], []>} : vector<1x128xbf16>, vector<128x128xbf16>, vector<1x128xf32> -> vector<1x128xf32>
    %c0_15 = arith.constant 0 : index
    %c0_16 = arith.constant 0 : index
    %18 = vector.load %arg7[%c0_15, %c0_16] : memref<1x128xf32, #tpu.memory_space<vmem>>, vector<1x128xf32>
    %19 = arith.addf %17, %18 : vector<1x128xf32>
    %cst_17 = arith.constant 0.000000e+00 : f32
    %20 = vector.broadcast %cst_17 : f32 to vector<1x128xf32>
    %21 = arith.maximumf %19, %20 : vector<1x128xf32>
    %22 = arith.truncf %21 : vector<1x128xf32> to vector<1x128xbf16>
    %c0_18 = arith.constant 0 : index
    %c0_19 = arith.constant 0 : index
    %23 = vector.load %arg8[%c0_18, %c0_19] : memref<128x512xbf16, #tpu.memory_space<vmem>>, vector<128x512xbf16>
    %cst_20 = arith.constant dense<0.000000e+00> : vector<1x512xf32>
    %24 = tpu.matmul %22, %23, %cst_20 {dimension_numbers = #tpu.dot_dimension_numbers<[1], [0], [0], [1], [0, 0, 1, 1], [], []>} : vector<1x128xbf16>, vector<128x512xbf16>, vector<1x512xf32> -> vector<1x512xf32>
    %c0_21 = arith.constant 0 : index
    %c0_22 = arith.constant 0 : index
    %25 = vector.load %arg9[%c0_21, %c0_22] : memref<1x512xf32, #tpu.memory_space<vmem>>, vector<1x512xf32>
    %26 = arith.addf %24, %25 : vector<1x512xf32>
    %27 = tpu.iota {dimensions = array<i32: 1>} : vector<1x128xi32>
    %28 = vector.extract_strided_slice %26 {offsets = [0, 0], sizes = [1, 128], strides = [1, 1]} : vector<1x512xf32> to vector<1x128xf32>
    %c8_i32 = arith.constant 8 : i32
    %29 = vector.broadcast %c8_i32 : i32 to vector<1x128xi32>
    %30 = arith.cmpi slt, %27, %29 : vector<1x128xi32>
    %cst_23 = arith.constant 0xFF800000 : f32
    %31 = vector.broadcast %cst_23 : f32 to vector<1x128xf32>
    %32 = arith.select %30, %28, %31 : vector<1x128xi1>, vector<1x128xf32>
    %cst_24 = arith.constant dense<0xFF800000> : vector<1xf32>
    %33 = vector.multi_reduction <maximumf>, %32, %cst_24 [1] : vector<1x128xf32> to vector<1xf32>
    %34 = vector.shape_cast %33 : vector<1xf32> to vector<1x1xf32>
    %35 = vector.broadcast %34 : vector<1x1xf32> to vector<1x128xf32>
    %36 = arith.subf %32, %35 : vector<1x128xf32>
    %37 = math.exp %36 : vector<1x128xf32>
    %cst_25 = arith.constant dense<0.000000e+00> : vector<1xf32>
    %38 = vector.multi_reduction <add>, %37, %cst_25 [1] : vector<1x128xf32> to vector<1xf32>
    %39 = vector.shape_cast %38 : vector<1xf32> to vector<1x1xf32>
    %40 = tpu.reciprocal %39 : vector<1x1xf32> -> vector<1x1xf32>
    %41 = vector.broadcast %40 : vector<1x1xf32> to vector<1x128xf32>
    %42 = arith.mulf %37, %41 : vector<1x128xf32>
    %43 = arith.truncf %28 : vector<1x128xf32> to vector<1x128xbf16>
    %44 = arith.extf %43 : vector<1x128xbf16> to vector<1x128xf32>
    %45 = arith.subf %28, %44 : vector<1x128xf32>
    %c1_i32 = arith.constant 1 : i32
    %46 = tpu.dynamic_rotate %45 by %c1_i32 dim 1 : vector<1x128xf32>, i32 -> vector<1x128xf32>
    %c8_i32_26 = arith.constant 8 : i32
    %47 = vector.broadcast %c8_i32_26 : i32 to vector<1x128xi32>
    %48 = arith.cmpi eq, %27, %47 : vector<1x128xi32>
    %c9_i32 = arith.constant 9 : i32
    %49 = vector.broadcast %c9_i32 : i32 to vector<1x128xi32>
    %50 = arith.cmpi eq, %27, %49 : vector<1x128xi32>
    %51 = arith.select %50, %46, %42 : vector<1x128xi1>, vector<1x128xf32>
    %52 = arith.select %48, %28, %51 : vector<1x128xi1>, vector<1x128xf32>
    %53 = arith.truncf %52 : vector<1x128xf32> to vector<1x128xbf16>
    %54 = vector.extract_strided_slice %26 {offsets = [0, 128], sizes = [1, 128], strides = [1, 1]} : vector<1x512xf32> to vector<1x128xf32>
    %c8_i32_27 = arith.constant 8 : i32
    %55 = vector.broadcast %c8_i32_27 : i32 to vector<1x128xi32>
    %56 = arith.cmpi slt, %27, %55 : vector<1x128xi32>
    %cst_28 = arith.constant 0xFF800000 : f32
    %57 = vector.broadcast %cst_28 : f32 to vector<1x128xf32>
    %58 = arith.select %56, %54, %57 : vector<1x128xi1>, vector<1x128xf32>
    %cst_29 = arith.constant dense<0xFF800000> : vector<1xf32>
    %59 = vector.multi_reduction <maximumf>, %58, %cst_29 [1] : vector<1x128xf32> to vector<1xf32>
    %60 = vector.shape_cast %59 : vector<1xf32> to vector<1x1xf32>
    %61 = vector.broadcast %60 : vector<1x1xf32> to vector<1x128xf32>
    %62 = arith.subf %58, %61 : vector<1x128xf32>
    %63 = math.exp %62 : vector<1x128xf32>
    %cst_30 = arith.constant dense<0.000000e+00> : vector<1xf32>
    %64 = vector.multi_reduction <add>, %63, %cst_30 [1] : vector<1x128xf32> to vector<1xf32>
    %65 = vector.shape_cast %64 : vector<1xf32> to vector<1x1xf32>
    %66 = tpu.reciprocal %65 : vector<1x1xf32> -> vector<1x1xf32>
    %67 = vector.broadcast %66 : vector<1x1xf32> to vector<1x128xf32>
    %68 = arith.mulf %63, %67 : vector<1x128xf32>
    %69 = arith.truncf %54 : vector<1x128xf32> to vector<1x128xbf16>
    %70 = arith.extf %69 : vector<1x128xbf16> to vector<1x128xf32>
    %71 = arith.subf %54, %70 : vector<1x128xf32>
    %c1_i32_31 = arith.constant 1 : i32
    %72 = tpu.dynamic_rotate %71 by %c1_i32_31 dim 1 : vector<1x128xf32>, i32 -> vector<1x128xf32>
    %c8_i32_32 = arith.constant 8 : i32
    %73 = vector.broadcast %c8_i32_32 : i32 to vector<1x128xi32>
    %74 = arith.cmpi eq, %27, %73 : vector<1x128xi32>
    %c9_i32_33 = arith.constant 9 : i32
    %75 = vector.broadcast %c9_i32_33 : i32 to vector<1x128xi32>
    %76 = arith.cmpi eq, %27, %75 : vector<1x128xi32>
    %77 = arith.select %76, %72, %68 : vector<1x128xi1>, vector<1x128xf32>
    %78 = arith.select %74, %54, %77 : vector<1x128xi1>, vector<1x128xf32>
    %79 = arith.truncf %78 : vector<1x128xf32> to vector<1x128xbf16>
    %80 = vector.extract_strided_slice %26 {offsets = [0, 256], sizes = [1, 128], strides = [1, 1]} : vector<1x512xf32> to vector<1x128xf32>
    %c8_i32_34 = arith.constant 8 : i32
    %81 = vector.broadcast %c8_i32_34 : i32 to vector<1x128xi32>
    %82 = arith.cmpi slt, %27, %81 : vector<1x128xi32>
    %cst_35 = arith.constant 0xFF800000 : f32
    %83 = vector.broadcast %cst_35 : f32 to vector<1x128xf32>
    %84 = arith.select %82, %80, %83 : vector<1x128xi1>, vector<1x128xf32>
    %cst_36 = arith.constant dense<0xFF800000> : vector<1xf32>
    %85 = vector.multi_reduction <maximumf>, %84, %cst_36 [1] : vector<1x128xf32> to vector<1xf32>
    %86 = vector.shape_cast %85 : vector<1xf32> to vector<1x1xf32>
    %87 = vector.broadcast %86 : vector<1x1xf32> to vector<1x128xf32>
    %88 = arith.subf %84, %87 : vector<1x128xf32>
    %89 = math.exp %88 : vector<1x128xf32>
    %cst_37 = arith.constant dense<0.000000e+00> : vector<1xf32>
    %90 = vector.multi_reduction <add>, %89, %cst_37 [1] : vector<1x128xf32> to vector<1xf32>
    %91 = vector.shape_cast %90 : vector<1xf32> to vector<1x1xf32>
    %92 = tpu.reciprocal %91 : vector<1x1xf32> -> vector<1x1xf32>
    %93 = vector.broadcast %92 : vector<1x1xf32> to vector<1x128xf32>
    %94 = arith.mulf %89, %93 : vector<1x128xf32>
    %95 = arith.truncf %80 : vector<1x128xf32> to vector<1x128xbf16>
    %96 = arith.extf %95 : vector<1x128xbf16> to vector<1x128xf32>
    %97 = arith.subf %80, %96 : vector<1x128xf32>
    %c1_i32_38 = arith.constant 1 : i32
    %98 = tpu.dynamic_rotate %97 by %c1_i32_38 dim 1 : vector<1x128xf32>, i32 -> vector<1x128xf32>
    %c8_i32_39 = arith.constant 8 : i32
    %99 = vector.broadcast %c8_i32_39 : i32 to vector<1x128xi32>
    %100 = arith.cmpi eq, %27, %99 : vector<1x128xi32>
    %c9_i32_40 = arith.constant 9 : i32
    %101 = vector.broadcast %c9_i32_40 : i32 to vector<1x128xi32>
    %102 = arith.cmpi eq, %27, %101 : vector<1x128xi32>
    %103 = arith.select %102, %98, %94 : vector<1x128xi1>, vector<1x128xf32>
    %104 = arith.select %100, %80, %103 : vector<1x128xi1>, vector<1x128xf32>
    %105 = arith.truncf %104 : vector<1x128xf32> to vector<1x128xbf16>
    %106 = vector.extract_strided_slice %26 {offsets = [0, 384], sizes = [1, 128], strides = [1, 1]} : vector<1x512xf32> to vector<1x128xf32>
    %c8_i32_41 = arith.constant 8 : i32
    %107 = vector.broadcast %c8_i32_41 : i32 to vector<1x128xi32>
    %108 = arith.cmpi slt, %27, %107 : vector<1x128xi32>
    %cst_42 = arith.constant 0xFF800000 : f32
    %109 = vector.broadcast %cst_42 : f32 to vector<1x128xf32>
    %110 = arith.select %108, %106, %109 : vector<1x128xi1>, vector<1x128xf32>
    %cst_43 = arith.constant dense<0xFF800000> : vector<1xf32>
    %111 = vector.multi_reduction <maximumf>, %110, %cst_43 [1] : vector<1x128xf32> to vector<1xf32>
    %112 = vector.shape_cast %111 : vector<1xf32> to vector<1x1xf32>
    %113 = vector.broadcast %112 : vector<1x1xf32> to vector<1x128xf32>
    %114 = arith.subf %110, %113 : vector<1x128xf32>
    %115 = math.exp %114 : vector<1x128xf32>
    %cst_44 = arith.constant dense<0.000000e+00> : vector<1xf32>
    %116 = vector.multi_reduction <add>, %115, %cst_44 [1] : vector<1x128xf32> to vector<1xf32>
    %117 = vector.shape_cast %116 : vector<1xf32> to vector<1x1xf32>
    %118 = tpu.reciprocal %117 : vector<1x1xf32> -> vector<1x1xf32>
    %119 = vector.broadcast %118 : vector<1x1xf32> to vector<1x128xf32>
    %120 = arith.mulf %115, %119 : vector<1x128xf32>
    %121 = arith.truncf %106 : vector<1x128xf32> to vector<1x128xbf16>
    %122 = arith.extf %121 : vector<1x128xbf16> to vector<1x128xf32>
    %123 = arith.subf %106, %122 : vector<1x128xf32>
    %c1_i32_45 = arith.constant 1 : i32
    %124 = tpu.dynamic_rotate %123 by %c1_i32_45 dim 1 : vector<1x128xf32>, i32 -> vector<1x128xf32>
    %c8_i32_46 = arith.constant 8 : i32
    %125 = vector.broadcast %c8_i32_46 : i32 to vector<1x128xi32>
    %126 = arith.cmpi eq, %27, %125 : vector<1x128xi32>
    %c9_i32_47 = arith.constant 9 : i32
    %127 = vector.broadcast %c9_i32_47 : i32 to vector<1x128xi32>
    %128 = arith.cmpi eq, %27, %127 : vector<1x128xi32>
    %129 = arith.select %128, %124, %120 : vector<1x128xi1>, vector<1x128xf32>
    %130 = arith.select %126, %106, %129 : vector<1x128xi1>, vector<1x128xf32>
    %131 = arith.truncf %130 : vector<1x128xf32> to vector<1x128xbf16>
    %132 = tpu.concatenate %53, %79, %105, %131 in 1 : vector<1x128xbf16>, vector<1x128xbf16>, vector<1x128xbf16>, vector<1x128xbf16> -> vector<1x512xbf16>
    %c0_48 = arith.constant 0 : index
    %c0_49 = arith.constant 0 : index
    %133 = vector.load %arg10[%c0_48, %c0_49] : memref<1x512xbf16, #tpu.memory_space<vmem>>, vector<1x512xbf16>
    tpu.vector_store %arg10[%c0_48, %c0_49], %132 {strides = array<i32>} : memref<1x512xbf16, #tpu.memory_space<vmem>>, vector<1x512xbf16>,
    return
  }
  func.func @transform_0(%arg0: i32) -> (i32, i32) {
    %c0_i32 = arith.constant 0 : i32
    %c0_i32_0 = arith.constant 0 : i32
    return %arg0, %c0_i32 : i32, i32
  }
  func.func @transform_1(%arg0: i32) -> (i32, i32) {
    %c0_i32 = arith.constant 0 : i32
    %c0_i32_0 = arith.constant 0 : i32
    %c0_i32_1 = arith.constant 0 : i32
    return %c0_i32, %c0_i32_0 : i32, i32
  }
  func.func @transform_2(%arg0: i32) -> (i32, i32) {
    %c0_i32 = arith.constant 0 : i32
    %c0_i32_0 = arith.constant 0 : i32
    %c0_i32_1 = arith.constant 0 : i32
    return %c0_i32, %c0_i32_0 : i32, i32
  }
  func.func @transform_3(%arg0: i32) -> (i32, i32) {
    %c0_i32 = arith.constant 0 : i32
    %c0_i32_0 = arith.constant 0 : i32
    %c0_i32_1 = arith.constant 0 : i32
    return %c0_i32, %c0_i32_0 : i32, i32
  }
  func.func @transform_4(%arg0: i32) -> (i32, i32) {
    %c0_i32 = arith.constant 0 : i32
    %c0_i32_0 = arith.constant 0 : i32
    %c0_i32_1 = arith.constant 0 : i32
    return %c0_i32, %c0_i32_0 : i32, i32
  }
  func.func @transform_5(%arg0: i32) -> (i32, i32) {
    %c0_i32 = arith.constant 0 : i32
    %c0_i32_0 = arith.constant 0 : i32
    %c0_i32_1 = arith.constant 0 : i32
    return %c0_i32, %c0_i32_0 : i32, i32
  }
  func.func @transform_6(%arg0: i32) -> (i32, i32) {
    %c0_i32 = arith.constant 0 : i32
    %c0_i32_0 = arith.constant 0 : i32
    %c0_i32_1 = arith.constant 0 : i32
    return %c0_i32, %c0_i32_0 : i32, i32
  }
  func.func @transform_7(%arg0: i32) -> (i32, i32) {
    %c0_i32 = arith.constant 0 : i32
    %c0_i32_0 = arith.constant 0 : i32
    %c0_i32_1 = arith.constant 0 : i32
    return %c0_i32, %c0_i32_0 : i32, i32
  }
  func.func @transform_8(%arg0: i32) -> (i32, i32) {
    %c0_i32 = arith.constant 0 : i32
    %c0_i32_0 = arith.constant 0 : i32
    %c0_i32_1 = arith.constant 0 : i32
    return %c0_i32, %c0_i32_0 : i32, i32
  }
  func.func @transform_9(%arg0: i32) -> (i32, i32) {
    %c0_i32 = arith.constant 0 : i32
    %c0_i32_0 = arith.constant 0 : i32
    return %arg0, %c0_i32 : i32, i32
  }
}

</mosaic_0001>

<llo_original>
// kernel: _forward_impl.1
$region0: #{_forward_impl.1}
  #allocation0 [shape = 'u32[]', space=smem, size = 0x4, offset = 0x4, fixed_abs, tag = 'smem constant byte address 0x4 - core index']
  #allocation1 [shape = 'u32[72,128]{1,0:T(1,128)}', space=vmem, size = 0x9000, scoped, tag = 'internal scratch']
  %s0 = inlined_call_operand.vmem [shape: f32[1,128], index: 0, kind: input, shape index: {}]
  %s1 = inlined_call_operand.hbm [shape: bf16[128,128], index: 1, kind: input, shape index: {}]
  %s2 = inlined_call_operand.vmem [shape: f32[1,128], index: 2, kind: input, shape index: {}]
  %s3 = inlined_call_operand.hbm [shape: bf16[128,128], index: 3, kind: input, shape index: {}]
  %s4 = inlined_call_operand.vmem [shape: f32[1,128], index: 4, kind: input, shape index: {}]
  %s5 = inlined_call_operand.hbm [shape: bf16[128,128], index: 5, kind: input, shape index: {}]
  %s6 = inlined_call_operand.vmem [shape: f32[1,128], index: 6, kind: input, shape index: {}]
  %s7 = inlined_call_operand.hbm [shape: bf16[128,512], index: 7, kind: input, shape index: {}]
  %s8 = inlined_call_operand.vmem [shape: f32[1,512], index: 8, kind: input, shape index: {}]
  %s9 = inlined_call_operand.vmem [shape: bf16[1,512], index: 9, kind: output, shape index: {}]
  %s10 = sld [smem:[#allocation0]]
  $region62: #{_forward_impl.1} parent=0
    _
  %s12 = ssub.s32 1, %s10
  %s13 = scalar_select 0, %s12, %s10
  $region1: #{_forward_impl.1} parent=0
    #allocation2 [shape = 'u8[32768]{0}', space=vmem, size = 0x8000, scoped, tag = 'input window, operand 1, single buffered']
    #allocation3 [shape = 's32[1]{0}', space=sflag, size = 0x4, scoped, tag = 'scoped memory for _forward_impl.1']
    #allocation4 [shape = 'u8[32768]{0}', space=vmem, size = 0x8000, scoped, tag = 'input window, operand 3, single buffered']
    #allocation5 [shape = 's32[1]{0}', space=sflag, size = 0x4, scoped, tag = 'scoped memory for _forward_impl.1']
    #allocation6 [shape = 'u8[32768]{0}', space=vmem, size = 0x8000, scoped, tag = 'input window, operand 5, single buffered']
    #allocation7 [shape = 'u8[131072]{0}', space=vmem, size = 0x20000, scoped, tag = 'input window, operand 7, single buffered']
    #allocation8 [shape = 's32[1]{0}', space=sflag, size = 0x4, scoped, tag = 'scoped memory for _forward_impl.1']
    %14 = vsyncpa [#allocation3], 0
    %15 = vsyncpa [#allocation5], 0
    %16 = vsyncpa [#allocation8], 0
    // Predicated region
    $region2: #{_forward_impl.1} parent=1 // pred_check
      _
    $region3: #{_forward_impl.1} parent=1 // pred_check_branch
      %18 = sbr.rel (0) target = $region5
    $region4: #{_forward_impl.1} parent=1 // pred_region
      _
    $region5: #{_forward_impl.1} parent=1 // pred_fallthru
      _
    // Predicated region
    $region6: #{_forward_impl.1} parent=1 // pred_check
      _
    $region7: #{_forward_impl.1} parent=1 // pred_check_branch
      %20 = sbr.rel (0) target = $region9
    $region8: #{_forward_impl.1} parent=1 // pred_region
      %22 = vsyncadd [#allocation3], 0
      %s23 = sshll.u32 %s1, 4
      %s24 = int_to_ptr.hbm [resolvable:$true] %s23
      %s25 = sshll.u32 [#allocation2], 4
      %s26 = int_to_ptr.vmem [resolvable:$true] %s25
      %31 = dma.hbm_to_vmem [thread:$0]  %s24, 1024, %s26, [#allocation3], 64, 64, 4
    $region9: #{_forward_impl.1} parent=1 // pred_fallthru
      _
    // Predicated region
    $region10: #{_forward_impl.1} parent=1 // pred_check
      _
    $region11: #{_forward_impl.1} parent=1 // pred_check_branch
      %33 = sbr.rel (0) target = $region13
    $region12: #{_forward_impl.1} parent=1 // pred_region
      _
    $region13: #{_forward_impl.1} parent=1 // pred_fallthru
      _
    // Predicated region
    $region14: #{_forward_impl.1} parent=1 // pred_check
      _
    $region15: #{_forward_impl.1} parent=1 // pred_check_branch
      %35 = sbr.rel (0) target = $region17
    $region16: #{_forward_impl.1} parent=1 // pred_region
      %37 = vsyncadd [#allocation5], 0
      %s38 = sshll.u32 %s3, 4
      %s39 = int_to_ptr.hbm [resolvable:$true] %s38
      %s40 = sshll.u32 [#allocation4], 4
      %s41 = int_to_ptr.vmem [resolvable:$true] %s40
      %46 = dma.hbm_to_vmem [thread:$0]  %s39, 1024, %s41, [#allocation5], 64, 64, 4
    $region17: #{_forward_impl.1} parent=1 // pred_fallthru
      _
    // Predicated region
    $region18: #{_forward_impl.1} parent=1 // pred_check
      _
    $region19: #{_forward_impl.1} parent=1 // pred_check_branch
      %48 = sbr.rel (0) target = $region21
    $region20: #{_forward_impl.1} parent=1 // pred_region
      _
    $region21: #{_forward_impl.1} parent=1 // pred_fallthru
      _
    // Predicated region
    $region22: #{_forward_impl.1} parent=1 // pred_check
      _
    $region23: #{_forward_impl.1} parent=1 // pred_check_branch
      %50 = sbr.rel (0) target = $region25
    $region24: #{_forward_impl.1} parent=1 // pred_region
      %52 = vsyncadd [#allocation5], 0
      %s53 = sshll.u32 %s5, 4
      %s54 = int_to_ptr.hbm [resolvable:$true] %s53
      %s55 = sshll.u32 [#allocation6], 4
      %s56 = int_to_ptr.vmem [resolvable:$true] %s55
      %61 = dma.hbm_to_vmem [thread:$0]  %s54, 1024, %s56, [#allocation5], 64, 64, 4
    $region25: #{_forward_impl.1} parent=1 // pred_fallthru
      _
    // Predicated region
    $region26: #{_forward_impl.1} parent=1 // pred_check
      _
    $region27: #{_forward_impl.1} parent=1 // pred_check_branch
      %63 = sbr.rel (0) target = $region29
    $region28: #{_forward_impl.1} parent=1 // pred_region
      _
    $region29: #{_forward_impl.1} parent=1 // pred_fallthru
      _
    // Predicated region
    $region30: #{_forward_impl.1} parent=1 // pred_check
      _
    $region31: #{_forward_impl.1} parent=1 // pred_check_branch
      %65 = sbr.rel (0) target = $region33
    $region32: #{_forward_impl.1} parent=1 // pred_region
      %67 = vsyncadd [#allocation8], 0
      %s68 = sshll.u32 %s7, 4
      %s69 = int_to_ptr.hbm [resolvable:$true] %s68
      %s70 = sshll.u32 [#allocation7], 4
      %s71 = int_to_ptr.vmem [resolvable:$true] %s70
      %76 = dma.hbm_to_vmem [thread:$0]  %s69, 4096, %s71, [#allocation8], 256, 256, 16
    $region33: #{_forward_impl.1} parent=1 // pred_fallthru
      _
    // Predicated region
    $region34: #{_forward_impl.1} parent=1 // pred_check
      _
    $region35: #{_forward_impl.1} parent=1 // pred_check_branch
      %78 = sbr.rel (0) target = $region37
    $region36: #{_forward_impl.1} parent=1 // pred_region
      _
    $region37: #{_forward_impl.1} parent=1 // pred_fallthru
      _
    // Predicated region
    $region38: #{_forward_impl.1} parent=1 // pred_check
      _
    $region39: #{_forward_impl.1} parent=1 // pred_check_branch
      %80 = sbr.rel (0) target = $region41
    $region40: #{_forward_impl.1} parent=1 // pred_region
      %82 = dma.done [#allocation3], 1024
    $region41: #{_forward_impl.1} parent=1 // pred_fallthru
      _
    // Predicated region
    $region42: #{_forward_impl.1} parent=1 // pred_check
      _
    $region43: #{_forward_impl.1} parent=1 // pred_check_branch
      %84 = sbr.rel (0) target = $region45
    $region44: #{_forward_impl.1} parent=1 // pred_region
      %86 = dma.done [#allocation5], 1024
    $region45: #{_forward_impl.1} parent=1 // pred_fallthru
      _
    // Predicated region
    $region46: #{_forward_impl.1} parent=1 // pred_check
      _
    $region47: #{_forward_impl.1} parent=1 // pred_check_branch
      %88 = sbr.rel (0) target = $region49
    $region48: #{_forward_impl.1} parent=1 // pred_region
      %90 = dma.done [#allocation5], 1024
    $region49: #{_forward_impl.1} parent=1 // pred_fallthru
      _
    // Predicated region
    $region50: #{_forward_impl.1} parent=1 // pred_check
      _
    $region51: #{_forward_impl.1} parent=1 // pred_check_branch
      %92 = sbr.rel (0) target = $region53
    $region52: #{_forward_impl.1} parent=1 // pred_region
      %94 = dma.done [#allocation8], 4096
    $region53: #{_forward_impl.1} parent=1 // pred_fallthru
      _
    %v95 = vld [vmem:[%s0] sm:$0x1]
    %v96 = vpack.c.bf16 %v95, %v95
    %v97 = vld [vmem:[#allocation2] sm:$0xf]
    %v98 = vld [vmem:[#allocation2 + $0x4] sm:$0xf]
    %v99 = vld [vmem:[#allocation2 + $0x8] sm:$0xf]
    %v100 = vld [vmem:[#allocation2 + $0xc] sm:$0xf]
    %v101 = vld [vmem:[#allocation2 + $0x10] sm:$0xf]
    %v102 = vld [vmem:[#allocation2 + $0x14] sm:$0xf]
    %v103 = vld [vmem:[#allocation2 + $0x18] sm:$0xf]
    %v104 = vld [vmem:[#allocation2 + $0x1c] sm:$0xf]
    %v105 = vld [vmem:[#allocation2 + $0x20] sm:$0xf]
    %v106 = vld [vmem:[#allocation2 + $0x24] sm:$0xf]
    %v107 = vld [vmem:[#allocation2 + $0x28] sm:$0xf]
    %v108 = vld [vmem:[#allocation2 + $0x2c] sm:$0xf]
    %v109 = vld [vmem:[#allocation2 + $0x30] sm:$0xf]
    %v110 = vld [vmem:[#allocation2 + $0x34] sm:$0xf]
    %v111 = vld [vmem:[#allocation2 + $0x38] sm:$0xf]
    %v112 = vld [vmem:[#allocation2 + $0x3c] sm:$0xf]
    %v113 = vld [vmem:[%s2] sm:$0x1]
    %v130 = vunpack.c.l.b16 %v97
    %v131 = vunpack.c.l.b16 %v98
    %v132 = vunpack.c.l.b16 %v99
    %v133 = vunpack.c.l.b16 %v100
    %v134 = vunpack.c.l.b16 %v101
    %v135 = vunpack.c.l.b16 %v102
    %v136 = vunpack.c.l.b16 %v103
    %v137 = vunpack.c.l.b16 %v104
    %v138 = vunpack.c.l.b16 %v105
    %v139 = vunpack.c.l.b16 %v106
    %v140 = vunpack.c.l.b16 %v107
    %v141 = vunpack.c.l.b16 %v108
    %v142 = vunpack.c.l.b16 %v109
    %v143 = vunpack.c.l.b16 %v110
    %v144 = vunpack.c.l.b16 %v111
    %v145 = vunpack.c.l.b16 %v112
    %v146 = vpack.c.b16 %v131, %v130
    %v147 = vpack.c.b16 %v133, %v132
    %v148 = vpack.c.b16 %v135, %v134
    %v149 = vpack.c.b16 %v137, %v136
    %v150 = vpack.c.b16 %v139, %v138
    %v151 = vpack.c.b16 %v141, %v140
    %v152 = vpack.c.b16 %v143, %v142
    %v153 = vpack.c.b16 %v145, %v144
    %162 = vmatpush.bf16.msra.mxu0 %v153
    %163 = vmatpush.bf16.msra.mxu0 %v152
    %164 = vmatpush.bf16.msra.mxu0 %v151
    %165 = vmatpush.bf16.msra.mxu0 %v150
    %166 = vmatpush.bf16.msra.mxu0 %v149
    %167 = vmatpush.bf16.msra.mxu0 %v148
    %168 = vmatpush.bf16.msra.mxu0 %v147
    %169 = vmatpush.bf16.msra.mxu0 %v146
    %170 = vmatmul.bf16.gmra.mxu0 %v96
    %v171 = vpop.f32.mrf.mxu0
    %v172 = vadd.f32 %v113, %v171
    %v173 = vpop.f32.mrf.mxu0
    %174 = vdwg.mxu0
    %v175 = vmax.f32 %v172, 0.0
    %v176 = vpack.c.bf16 %v175, %v175
    %v177 = vld [vmem:[#allocation4] sm:$0xf]
    %v178 = vld [vmem:[#allocation4 + $0x4] sm:$0xf]
    %v179 = vld [vmem:[#allocation4 + $0x8] sm:$0xf]
    %v180 = vld [vmem:[#allocation4 + $0xc] sm:$0xf]
    %v181 = vld [vmem:[#allocation4 + $0x10] sm:$0xf]
    %v182 = vld [vmem:[#allocation4 + $0x14] sm:$0xf]
    %v183 = vld [vmem:[#allocation4 + $0x18] sm:$0xf]
    %v184 = vld [vmem:[#allocation4 + $0x1c] sm:$0xf]
    %v185 = vld [vmem:[#allocation4 + $0x20] sm:$0xf]
    %v186 = vld [vmem:[#allocation4 + $0x24] sm:$0xf]
    %v187 = vld [vmem:[#allocation4 + $0x28] sm:$0xf]
    %v188 = vld [vmem:[#allocation4 + $0x2c] sm:$0xf]
    %v189 = vld [vmem:[#allocation4 + $0x30] sm:$0xf]
    %v190 = vld [vmem:[#allocation4 + $0x34] sm:$0xf]
    %v191 = vld [vmem:[#allocation4 + $0x38] sm:$0xf]
    %v192 = vld [vmem:[#allocation4 + $0x3c] sm:$0xf]
    %v193 = vld [vmem:[%s4] sm:$0x1]
    %v210 = vunpack.c.l.b16 %v177
    %v211 = vunpack.c.l.b16 %v178
    %v212 = vunpack.c.l.b16 %v179
    %v213 = vunpack.c.l.b16 %v180
    %v214 = vunpack.c.l.b16 %v181
    %v215 = vunpack.c.l.b16 %v182
    %v216 = vunpack.c.l.b16 %v183
    %v217 = vunpack.c.l.b16 %v184
    %v218 = vunpack.c.l.b16 %v185
    %v219 = vunpack.c.l.b16 %v186
    %v220 = vunpack.c.l.b16 %v187
    %v221 = vunpack.c.l.b16 %v188
    %v222 = vunpack.c.l.b16 %v189
    %v223 = vunpack.c.l.b16 %v190
    %v224 = vunpack.c.l.b16 %v191
    %v225 = vunpack.c.l.b16 %v192
    %v226 = vpack.c.b16 %v211, %v210
    %v227 = vpack.c.b16 %v213, %v212
    %v228 = vpack.c.b16 %v215, %v214
    %v229 = vpack.c.b16 %v217, %v216
    %v230 = vpack.c.b16 %v219, %v218
    %v231 = vpack.c.b16 %v221, %v220
    %v232 = vpack.c.b16 %v223, %v222
    %v233 = vpack.c.b16 %v225, %v224
    %242 = vmatpush.bf16.msra.mxu0 %v233
    %243 = vmatpush.bf16.msra.mxu0 %v232
    %244 = vmatpush.bf16.msra.mxu0 %v231
    %245 = vmatpush.bf16.msra.mxu0 %v230
    %246 = vmatpush.bf16.msra.mxu0 %v229
    %247 = vmatpush.bf16.msra.mxu0 %v228
    %248 = vmatpush.bf16.msra.mxu0 %v227
    %249 = vmatpush.bf16.msra.mxu0 %v226
    %250 = vmatmul.bf16.gmra.mxu0 %v176
    %v251 = vpop.f32.mrf.mxu0
    %v252 = vadd.f32 %v193, %v251
    %v253 = vpop.f32.mrf.mxu0
    %254 = vdwg.mxu0
    %v255 = vmax.f32 %v252, 0.0
    %v256 = vpack.c.bf16 %v255, %v255
    %v257 = vld [vmem:[#allocation6] sm:$0xf]
    %v258 = vld [vmem:[#allocation6 + $0x4] sm:$0xf]
    %v259 = vld [vmem:[#allocation6 + $0x8] sm:$0xf]
    %v260 = vld [vmem:[#allocation6 + $0xc] sm:$0xf]
    %v261 = vld [vmem:[#allocation6 + $0x10] sm:$0xf]
    %v262 = vld [vmem:[#allocation6 + $0x14] sm:$0xf]
    %v263 = vld [vmem:[#allocation6 + $0x18] sm:$0xf]
    %v264 = vld [vmem:[#allocation6 + $0x1c] sm:$0xf]
    %v265 = vld [vmem:[#allocation6 + $0x20] sm:$0xf]
    %v266 = vld [vmem:[#allocation6 + $0x24] sm:$0xf]
    %v267 = vld [vmem:[#allocation6 + $0x28] sm:$0xf]
    %v268 = vld [vmem:[#allocation6 + $0x2c] sm:$0xf]
    %v269 = vld [vmem:[#allocation6 + $0x30] sm:$0xf]
    %v270 = vld [vmem:[#allocation6 + $0x34] sm:$0xf]
    %v271 = vld [vmem:[#allocation6 + $0x38] sm:$0xf]
    %v272 = vld [vmem:[#allocation6 + $0x3c] sm:$0xf]
    %v273 = vld [vmem:[%s6] sm:$0x1]
    %v290 = vunpack.c.l.b16 %v257
    %v291 = vunpack.c.l.b16 %v258
    %v292 = vunpack.c.l.b16 %v259
    %v293 = vunpack.c.l.b16 %v260
    %v294 = vunpack.c.l.b16 %v261
    %v295 = vunpack.c.l.b16 %v262
    %v296 = vunpack.c.l.b16 %v263
    %v297 = vunpack.c.l.b16 %v264
    %v298 = vunpack.c.l.b16 %v265
    %v299 = vunpack.c.l.b16 %v266
    %v300 = vunpack.c.l.b16 %v267
    %v301 = vunpack.c.l.b16 %v268
    %v302 = vunpack.c.l.b16 %v269
    %v303 = vunpack.c.l.b16 %v270
    %v304 = vunpack.c.l.b16 %v271
    %v305 = vunpack.c.l.b16 %v272
    %v306 = vpack.c.b16 %v291, %v290
    %v307 = vpack.c.b16 %v293, %v292
    %v308 = vpack.c.b16 %v295, %v294
    %v309 = vpack.c.b16 %v297, %v296
    %v310 = vpack.c.b16 %v299, %v298
    %v311 = vpack.c.b16 %v301, %v300
    %v312 = vpack.c.b16 %v303, %v302
    %v313 = vpack.c.b16 %v305, %v304
    %322 = vmatpush.bf16.msra.mxu0 %v313
    %323 = vmatpush.bf16.msra.mxu0 %v312
    %324 = vmatpush.bf16.msra.mxu0 %v311
    %325 = vmatpush.bf16.msra.mxu0 %v310
    %326 = vmatpush.bf16.msra.mxu0 %v309
    %327 = vmatpush.bf16.msra.mxu0 %v308
    %328 = vmatpush.bf16.msra.mxu0 %v307
    %329 = vmatpush.bf16.msra.mxu0 %v306
    %330 = vmatmul.bf16.gmra.mxu0 %v256
    %v331 = vpop.f32.mrf.mxu0
    %v332 = vadd.f32 %v273, %v331
    %v333 = vpop.f32.mrf.mxu0
    %334 = vdwg.mxu0
    %v335 = vmax.f32 %v332, 0.0
    %v336 = vpack.c.bf16 %v335, %v335
    %v337 = vld [vmem:[#allocation7] sm:$0xff]
    %v338 = vld [vmem:[#allocation7 + $0x8] sm:$0xff]
    %v339 = vld [vmem:[#allocation7 + $0x10] sm:$0xff]
    %v340 = vld [vmem:[#allocation7 + $0x18] sm:$0xff]
    %v341 = vld [vmem:[#allocation7 + $0x20] sm:$0xff]
    %v342 = vld [vmem:[#allocation7 + $0x28] sm:$0xff]
    %v343 = vld [vmem:[#allocation7 + $0x30] sm:$0xff]
    %v344 = vld [vmem:[#allocation7 + $0x38] sm:$0xff]
    %v345 = vld [vmem:[#allocation7 + $0x40] sm:$0xff]
    %v346 = vld [vmem:[#allocation7 + $0x48] sm:$0xff]
    %v347 = vld [vmem:[#allocation7 + $0x50] sm:$0xff]
    %v348 = vld [vmem:[#allocation7 + $0x58] sm:$0xff]
    %v349 = vld [vmem:[#allocation7 + $0x60] sm:$0xff]
    %v350 = vld [vmem:[#allocation7 + $0x68] sm:$0xff]
    %v351 = vld [vmem:[#allocation7 + $0x70] sm:$0xff]
    %v352 = vld [vmem:[#allocation7 + $0x78] sm:$0xff]
    %v353 = vld [vmem:[#allocation7 + $0x80] sm:$0xff]
    %v354 = vld [vmem:[#allocation7 + $0x88] sm:$0xff]
    %v355 = vld [vmem:[#allocation7 + $0x90] sm:$0xff]
    %v356 = vld [vmem:[#allocation7 + $0x98] sm:$0xff]
    %v357 = vld [vmem:[#allocation7 + $0xa0] sm:$0xff]
    %v358 = vld [vmem:[#allocation7 + $0xa8] sm:$0xff]
    %v359 = vld [vmem:[#allocation7 + $0xb0] sm:$0xff]
    %v360 = vld [vmem:[#allocation7 + $0xb8] sm:$0xff]
    %v361 = vld [vmem:[#allocation7 + $0xc0] sm:$0xff]
    %v362 = vld [vmem:[#allocation7 + $0xc8] sm:$0xff]
    %v363 = vld [vmem:[#allocation7 + $0xd0] sm:$0xff]
    %v364 = vld [vmem:[#allocation7 + $0xd8] sm:$0xff]
    %v365 = vld [vmem:[#allocation7 + $0xe0] sm:$0xff]
    %v366 = vld [vmem:[#allocation7 + $0xe8] sm:$0xff]
    %v367 = vld [vmem:[#allocation7 + $0xf0] sm:$0xff]
    %v368 = vld [vmem:[#allocation7 + $0xf8] sm:$0xff]
    %v369 = vld [vmem:[%s8] sm:$0xf]
    %v402 = vunpack.c.l.b16 %v337
    %v403 = vunpack.c.h.b16 %v337
    %v404 = vunpack.c.l.b16 %v338
    %v405 = vunpack.c.h.b16 %v338
    %v406 = vunpack.c.l.b16 %v339
    %v407 = vunpack.c.h.b16 %v339
    %v408 = vunpack.c.l.b16 %v340
    %v409 = vunpack.c.h.b16 %v340
    %v410 = vunpack.c.l.b16 %v341
    %v411 = vunpack.c.h.b16 %v341
    %v412 = vunpack.c.l.b16 %v342
    %v413 = vunpack.c.h.b16 %v342
    %v414 = vunpack.c.l.b16 %v343
    %v415 = vunpack.c.h.b16 %v343
    %v416 = vunpack.c.l.b16 %v344
    %v417 = vunpack.c.h.b16 %v344
    %v418 = vunpack.c.l.b16 %v345
    %v419 = vunpack.c.h.b16 %v345
    %v420 = vunpack.c.l.b16 %v346
    %v421 = vunpack.c.h.b16 %v346
    %v422 = vunpack.c.l.b16 %v347
    %v423 = vunpack.c.h.b16 %v347
    %v424 = vunpack.c.l.b16 %v348
    %v425 = vunpack.c.h.b16 %v348
    %v426 = vunpack.c.l.b16 %v349
    %v427 = vunpack.c.h.b16 %v349
    %v428 = vunpack.c.l.b16 %v350
    %v429 = vunpack.c.h.b16 %v350
    %v430 = vunpack.c.l.b16 %v351
    %v431 = vunpack.c.h.b16 %v351
    %v432 = vunpack.c.l.b16 %v352
    %v433 = vunpack.c.h.b16 %v352
    %v434 = vunpack.c.l.b16 %v353
    %v435 = vunpack.c.h.b16 %v353
    %v436 = vunpack.c.l.b16 %v354
    %v437 = vunpack.c.h.b16 %v354
    %v438 = vunpack.c.l.b16 %v355
    %v439 = vunpack.c.h.b16 %v355
    %v440 = vunpack.c.l.b16 %v356
    %v441 = vunpack.c.h.b16 %v356
    %v442 = vunpack.c.l.b16 %v357
    %v443 = vunpack.c.h.b16 %v357
    %v444 = vunpack.c.l.b16 %v358
    %v445 = vunpack.c.h.b16 %v358
    %v446 = vunpack.c.l.b16 %v359
    %v447 = vunpack.c.h.b16 %v359
    %v448 = vunpack.c.l.b16 %v360
    %v449 = vunpack.c.h.b16 %v360
    %v450 = vunpack.c.l.b16 %v361
    %v451 = vunpack.c.h.b16 %v361
    %v452 = vunpack.c.l.b16 %v362
    %v453 = vunpack.c.h.b16 %v362
    %v454 = vunpack.c.l.b16 %v363
    %v455 = vunpack.c.h.b16 %v363
    %v456 = vunpack.c.l.b16 %v364
    %v457 = vunpack.c.h.b16 %v364
    %v458 = vunpack.c.l.b16 %v365
    %v459 = vunpack.c.h.b16 %v365
    %v460 = vunpack.c.l.b16 %v366
    %v461 = vunpack.c.h.b16 %v366
    %v462 = vunpack.c.l.b16 %v367
    %v463 = vunpack.c.h.b16 %v367
    %v464 = vunpack.c.l.b16 %v368
    %v465 = vunpack.c.h.b16 %v368
    %v466 = vpack.c.b16 %v406, %v402
    %v467 = vpack.c.b16 %v407, %v403
    %v468 = vpack.c.b16 %v408, %v404
    %v469 = vpack.c.b16 %v409, %v405
    %v470 = vpack.c.b16 %v414, %v410
    %v471 = vpack.c.b16 %v415, %v411
    %v472 = vpack.c.b16 %v416, %v412
    %v473 = vpack.c.b16 %v417, %v413
    %v474 = vpack.c.b16 %v422, %v418
    %v475 = vpack.c.b16 %v423, %v419
    %v476 = vpack.c.b16 %v424, %v420
    %v477 = vpack.c.b16 %v425, %v421
    %v478 = vpack.c.b16 %v430, %v426
    %v479 = vpack.c.b16 %v431, %v427
    %v480 = vpack.c.b16 %v432, %v428
    %v481 = vpack.c.b16 %v433, %v429
    %v482 = vpack.c.b16 %v438, %v434
    %v483 = vpack.c.b16 %v439, %v435
    %v484 = vpack.c.b16 %v440, %v436
    %v485 = vpack.c.b16 %v441, %v437
    %v486 = vpack.c.b16 %v446, %v442
    %v487 = vpack.c.b16 %v447, %v443
    %v488 = vpack.c.b16 %v448, %v444
    %v489 = vpack.c.b16 %v449, %v445
    %v490 = vpack.c.b16 %v454, %v450
    %v491 = vpack.c.b16 %v455, %v451
    %v492 = vpack.c.b16 %v456, %v452
    %v493 = vpack.c.b16 %v457, %v453
    %v494 = vpack.c.b16 %v462, %v458
    %v495 = vpack.c.b16 %v463, %v459
    %v496 = vpack.c.b16 %v464, %v460
    %v497 = vpack.c.b16 %v465, %v461
    %v531 = vperm.slane %v369, 0
    %v532 = vperm.slane %v369, 1
    %v533 = vperm.slane %v369, 2
    %v534 = vperm.slane %v369, 3
    %539 = vmatpush.bf16.msra.mxu0 %v494
    %540 = vmatpush.bf16.msra.mxu0 %v490
    %541 = vmatpush.bf16.msra.mxu0 %v486
    %542 = vmatpush.bf16.msra.mxu0 %v482
    %543 = vmatpush.bf16.msra.mxu0 %v478
    %544 = vmatpush.bf16.msra.mxu0 %v474
    %545 = vmatpush.bf16.msra.mxu0 %v470
    %546 = vmatpush.bf16.msra.mxu0 %v466
    %547 = vmatmul.bf16.gmra.mxu0 %v336
    %v548 = vpop.f32.mrf.mxu0
    %v549 = vadd.f32 %v531, %v548
    %v550 = vpop.f32.mrf.mxu0
    %551 = vdwg.mxu0
    %552 = vmatpush.bf16.msra.mxu0 %v495
    %553 = vmatpush.bf16.msra.mxu0 %v491
    %554 = vmatpush.bf16.msra.mxu0 %v487
    %555 = vmatpush.bf16.msra.mxu0 %v483
    %556 = vmatpush.bf16.msra.mxu0 %v479
    %557 = vmatpush.bf16.msra.mxu0 %v475
    %558 = vmatpush.bf16.msra.mxu0 %v471
    %559 = vmatpush.bf16.msra.mxu0 %v467
    %560 = vmatmul.bf16.gmra.mxu0 %v336
    %v561 = vpop.f32.mrf.mxu0
    %v562 = vadd.f32 %v532, %v561
    %v563 = vpop.f32.mrf.mxu0
    %564 = vdwg.mxu0
    %565 = vmatpush.bf16.msra.mxu0 %v496
    %566 = vmatpush.bf16.msra.mxu0 %v492
    %567 = vmatpush.bf16.msra.mxu0 %v488
    %568 = vmatpush.bf16.msra.mxu0 %v484
    %569 = vmatpush.bf16.msra.mxu0 %v480
    %570 = vmatpush.bf16.msra.mxu0 %v476
    %571 = vmatpush.bf16.msra.mxu0 %v472
    %572 = vmatpush.bf16.msra.mxu0 %v468
    %573 = vmatmul.bf16.gmra.mxu0 %v336
    %v574 = vpop.f32.mrf.mxu0
    %v575 = vadd.f32 %v533, %v574
    %v576 = vpop.f32.mrf.mxu0
    %577 = vdwg.mxu0
    %578 = vmatpush.bf16.msra.mxu0 %v497
    %579 = vmatpush.bf16.msra.mxu0 %v493
    %580 = vmatpush.bf16.msra.mxu0 %v489
    %581 = vmatpush.bf16.msra.mxu0 %v485
    %582 = vmatpush.bf16.msra.mxu0 %v481
    %583 = vmatpush.bf16.msra.mxu0 %v477
    %584 = vmatpush.bf16.msra.mxu0 %v473
    %585 = vmatpush.bf16.msra.mxu0 %v469
    %586 = vmatmul.bf16.gmra.mxu0 %v336
    %v587 = vpop.f32.mrf.mxu0
    %v588 = vadd.f32 %v534, %v587
    %v589 = vpop.f32.mrf.mxu0
    %590 = vdwg.mxu0
    %v591 = vlaneseq
    %v592 = vand.u32 %v591, 127
    %vm593 = vcmp.lt.s32.totalorder %v592, 8
    %v594 = vsel %vm593, %v549, -inf
    %vm595 = vcmask 1040384
    %v596 = vsel %vm595, %v594, -inf
    %597 = vmax.xlane.f32.xlu0 %v596
    %v598 = vpop.xlane.xlu0 %597
    %v599 = vsub.f32 %v594, %v598
    %v600 = vmul.f32 %v599, 1.442695
    %v601 = vpow.pop %v600
    %v602 = vsel %vm595, %v601, 0.0
    %603 = vadd.xlane.f32.xlu0 %v602
    %v604 = vpop.xlane.xlu0 %603
    %v605 = vrcp.pop %v604
    %v606 = vmul.f32 %v604, %v605
    %v607 = vsub.f32 1.0, %v606
    %v608 = vmul.f32 %v605, %v607
    %v609 = vadd.f32 %v605, %v608
    %vm610 = vweird.f32 %v604
    %vm611 = vweird.f32 %v605
    %vm612 = vmor %vm610, %vm611
    %v613 = vsel %vm612, %v605, %v609
    %v614 = vand.u32 2147483647, %v604
    %vm615 = vcmp.eq.f32.partialorder %v614, 8.507059e+37
    %v616 = vand.u32 %v604, 2147483648
    %v617 = vor.u32 1.1754944e-38, %v616
    %v618 = vsel %vm615, %v617, %v613
    %v619 = vmul.f32 %v601, %v618
    %v620 = vpack.c.bf16 %v549, %v549
    %v621 = vunpack.c.l.bf16 %v620
    %v622 = vsub.f32 %v549, %v621
    %623 = vrot.lane.b32.xlu0 %v622, 1
    %v624 = vpop.permute.xlu0 %623
    %vm625 = vcmp.eq.s32.totalorder %v592, 8
    %vm626 = vcmp.eq.s32.totalorder %v592, 9
    %v627 = vsel %vm626, %v624, %v619
    %v628 = vsel %vm625, %v549, %v627
    %v629 = vpack.c.bf16 %v628, %v628
    %v630 = vsel %vm593, %v562, -inf
    %v631 = vsel %vm595, %v630, -inf
    %632 = vmax.xlane.f32.xlu0 %v631
    %v633 = vpop.xlane.xlu0 %632
    %v634 = vsub.f32 %v630, %v633
    %v635 = vmul.f32 %v634, 1.442695
    %v636 = vpow.pop %v635
    %v637 = vsel %vm595, %v636, 0.0
    %638 = vadd.xlane.f32.xlu0 %v637
    %v639 = vpop.xlane.xlu0 %638
    %v640 = vrcp.pop %v639
    %v641 = vmul.f32 %v639, %v640
    %v642 = vsub.f32 1.0, %v641
    %v643 = vmul.f32 %v640, %v642
    %v644 = vadd.f32 %v640, %v643
    %vm645 = vweird.f32 %v639
    %vm646 = vweird.f32 %v640
    %vm647 = vmor %vm645, %vm646
    %v648 = vsel %vm647, %v640, %v644
    %v649 = vand.u32 2147483647, %v639
    %vm650 = vcmp.eq.f32.partialorder %v649, 8.507059e+37
    %v651 = vand.u32 %v639, 2147483648
    %v652 = vor.u32 1.1754944e-38, %v651
    %v653 = vsel %vm650, %v652, %v648
    %v654 = vmul.f32 %v636, %v653
    %v655 = vpack.c.bf16 %v562, %v562
    %v656 = vunpack.c.l.bf16 %v655
    %v657 = vsub.f32 %v562, %v656
    %658 = vrot.lane.b32.xlu0 %v657, 1
    %v659 = vpop.permute.xlu0 %658
    %v660 = vsel %vm626, %v659, %v654
    %v661 = vsel %vm625, %v562, %v660
    %v662 = vpack.c.bf16 %v661, %v661
    %v663 = vsel %vm593, %v575, -inf
    %v664 = vsel %vm595, %v663, -inf
    %665 = vmax.xlane.f32.xlu0 %v664
    %v666 = vpop.xlane.xlu0 %665
    %v667 = vsub.f32 %v663, %v666
    %v668 = vmul.f32 %v667, 1.442695
    %v669 = vpow.pop %v668
    %v670 = vsel %vm595, %v669, 0.0
    %671 = vadd.xlane.f32.xlu0 %v670
    %v672 = vpop.xlane.xlu0 %671
    %v673 = vrcp.pop %v672
    %v674 = vmul.f32 %v672, %v673
    %v675 = vsub.f32 1.0, %v674
    %v676 = vmul.f32 %v673, %v675
    %v677 = vadd.f32 %v673, %v676
    %vm678 = vweird.f32 %v672
    %vm679 = vweird.f32 %v673
    %vm680 = vmor %vm678, %vm679
    %v681 = vsel %vm680, %v673, %v677
    %v682 = vand.u32 2147483647, %v672
    %vm683 = vcmp.eq.f32.partialorder %v682, 8.507059e+37
    %v684 = vand.u32 %v672, 2147483648
    %v685 = vor.u32 1.1754944e-38, %v684
    %v686 = vsel %vm683, %v685, %v681
    %v687 = vmul.f32 %v669, %v686
    %v688 = vpack.c.bf16 %v575, %v575
    %v689 = vunpack.c.l.bf16 %v688
    %v690 = vsub.f32 %v575, %v689
    %691 = vrot.lane.b32.xlu0 %v690, 1
    %v692 = vpop.permute.xlu0 %691
    %v693 = vsel %vm626, %v692, %v687
    %v694 = vsel %vm625, %v575, %v693
    %v695 = vpack.c.bf16 %v694, %v694
    %v696 = vsel %vm593, %v588, -inf
    %v697 = vsel %vm595, %v696, -inf
    %698 = vmax.xlane.f32.xlu0 %v697
    %v699 = vpop.xlane.xlu0 %698
    %v700 = vsub.f32 %v696, %v699
    %v701 = vmul.f32 %v700, 1.442695
    %v702 = vpow.pop %v701
    %v703 = vsel %vm595, %v702, 0.0
    %704 = vadd.xlane.f32.xlu0 %v703
    %v705 = vpop.xlane.xlu0 %704
    %v706 = vrcp.pop %v705
    %v707 = vmul.f32 %v705, %v706
    %v708 = vsub.f32 1.0, %v707
    %v709 = vmul.f32 %v706, %v708
    %v710 = vadd.f32 %v706, %v709
    %vm711 = vweird.f32 %v705
    %vm712 = vweird.f32 %v706
    %vm713 = vmor %vm711, %vm712
    %v714 = vsel %vm713, %v706, %v710
    %v715 = vand.u32 2147483647, %v705
    %vm716 = vcmp.eq.f32.partialorder %v715, 8.507059e+37
    %v717 = vand.u32 %v705, 2147483648
    %v718 = vor.u32 1.1754944e-38, %v717
    %v719 = vsel %vm716, %v718, %v714
    %v720 = vmul.f32 %v702, %v719
    %v721 = vpack.c.bf16 %v588, %v588
    %v722 = vunpack.c.l.bf16 %v721
    %v723 = vsub.f32 %v588, %v722
    %724 = vrot.lane.b32.xlu0 %v723, 1
    %v725 = vpop.permute.xlu0 %724
    %v726 = vsel %vm626, %v725, %v720
    %v727 = vsel %vm625, %v588, %v726
    %v728 = vpack.c.bf16 %v727, %v727
    %v732 = vrot.slane %v662, 7
    %v733 = vrot.slane %v695, 6
    %v734 = vrot.slane %v728, 5
    %v737 = vsel %vm595, %v629, %v732
    %vm738 = vcmask 1042434
    %v741 = vsel %vm738, %v733, %v734
    %vm742 = vcmask 1041408
    %v743 = vsel %vm742, %v737, %v741
    %vm745 = vcmask 1040384
    %vm746 = vsmask.f32 256
    %vm747 = vmand %vm745, %vm746
    %vm748 = vcmask 1041409
    %vm749 = vsmask.f32 1280
    %vm750 = vmand %vm748, %vm749
    %vm751 = vmor %vm750, %vm747
    %vm752 = vcmask 1042434
    %vm753 = vsmask.f32 2304
    %vm754 = vmand %vm752, %vm753
    %vm755 = vmor %vm754, %vm751
    %vm756 = vcmask 1043459
    %vm757 = vsmask.f32 3328
    %vm758 = vmand %vm756, %vm757
    %vm759 = vmor %vm758, %vm755
    %v760 = vld [vmem:[%s9] sm:$0xf]
    %v761 = vsel %vm759, %v743, %v760
    %762 = vst [vmem:[%s9] sm:$0xf] %v761
    // Predicated region
    $region54: #{_forward_impl.1} parent=1 // pred_check
      _
    $region55: #{_forward_impl.1} parent=1 // pred_check_branch
      %764 = sbr.rel (0) target = $region57
    $region56: #{_forward_impl.1} parent=1 // pred_region
      _
    $region57: #{_forward_impl.1} parent=1 // pred_fallthru
      _
    // Predicated region
    $region58: #{_forward_impl.1} parent=1 // pred_check
      _
    $region59: #{_forward_impl.1} parent=1 // pred_check_branch
      %766 = sbr.rel (0) target = $region61
    $region60: #{_forward_impl.1} parent=1 // pred_region
      _
    $region61: #{_forward_impl.1} parent=1 // pred_fallthru
      _
    %767 = vsyncpa [#allocation3], 1
    %768 = vsyncpa [#allocation5], 1
    %769 = vsyncpa [#allocation8], 1

</llo_original>
